<compile_context>
chip_gen: v7x
topology: tpu7x:2x2x1
jax: 0.10.0
libtpu: 0.0.40
codegen_flags: <defaults>
</compile_context>

<pallas_src>
import functools

import jax
import jax.numpy as jnp
from jax.experimental import pallas as pl
from jax.experimental.pallas import tpu as pltpu

BN_EPS = 1e-5
L2_EPS = 1e-12
LANE = 128
SUBLANE = 8
VMEM_LIMIT = 40 * 1024 * 1024  # safe on v7x (64 MiB physical); plenty on v5e/v6e


def _round_up(x, m):
    return ((x + m - 1) // m) * m


def _pad2d(x, rows, cols):
    return jnp.pad(x, ((0, rows - x.shape[0]), (0, cols - x.shape[1])))


def _l2_normalize(x):
    # x * rsqrt(max(||x||^2, eps^2))  ==  x / max(||x||, eps)  (F.normalize)
    ss = jnp.sum(x * x, axis=-1, keepdims=True)
    return x * jax.lax.rsqrt(jnp.maximum(ss, L2_EPS * L2_EPS))


def _partial_stats_block(h_f32, row_start, n_valid):
    """(8, HP) block: row 0 = masked sum, row 1 = masked sum-of-squares."""
    hp = h_f32.shape[-1]
    rows = jax.lax.broadcasted_iota(jnp.int32, h_f32.shape, 0) + row_start
    hm = jnp.where(rows < n_valid, h_f32, 0.0)      # mask ragged boundary rows
    psum = jnp.sum(hm, axis=0, keepdims=True)
    pssq = jnp.sum(hm * hm, axis=0, keepdims=True)
    pad = jnp.zeros((SUBLANE - 2, hp), jnp.float32)
    return jnp.concatenate([psum, pssq, pad], axis=0)


# ----------------------------------------------------------------------------
# Pass 1: h0 = feat @ W0 + b0 (tiled over rows) + per-tile BN0 partial stats
# ----------------------------------------------------------------------------
def _layer0_kernel(n_valid, feat_ref, w0_ref, b0_ref, h0_ref, st_ref):
    i = pl.program_id(0)
    h = jnp.dot(feat_ref[...].astype(w0_ref.dtype), w0_ref[...],
                preferred_element_type=jnp.float32) + b0_ref[...]
    h0_ref[...] = h.astype(h0_ref.dtype)
    st_ref[...] = _partial_stats_block(h, i * h.shape[0], n_valid).reshape(st_ref.shape)


# ----------------------------------------------------------------------------
# Pass 2: x0 = l2(relu(BN0(h0))) ; h1 = x0 @ W1 + b1 ; per-tile BN1 partials
# (x0 is NOT written back; pass 3 recomputes it.)
# ----------------------------------------------------------------------------
def _layer1_kernel(n_valid, h0_ref, sc0_ref, sh0_ref, w1_ref, b1_ref,
                   h1_ref, st_ref):
    i = pl.program_id(0)
    x = jnp.maximum(h0_ref[...].astype(jnp.float32) * sc0_ref[...] + sh0_ref[...], 0.0)
    x = _l2_normalize(x)
    h = jnp.dot(x.astype(w1_ref.dtype), w1_ref[...],
                preferred_element_type=jnp.float32) + b1_ref[...]
    h1_ref[...] = h.astype(h1_ref.dtype)
    st_ref[...] = _partial_stats_block(h, i * x.shape[0], n_valid).reshape(st_ref.shape)


# ----------------------------------------------------------------------------
# Pass 3: x_l = l2(BN1(h1) + l2(relu(BN0(h0))))   (x0 recomputed on the VPU)
# ----------------------------------------------------------------------------
def _embed_kernel(h0_ref, h1_ref, sc0_ref, sh0_ref, sc1_ref, sh1_ref, xl_ref):
    x0 = jnp.maximum(h0_ref[...].astype(jnp.float32) * sc0_ref[...] + sh0_ref[...], 0.0)
    x0 = _l2_normalize(x0)
    x = h1_ref[...].astype(jnp.float32) * sc1_ref[...] + sh1_ref[...] + x0
    xl_ref[...] = _l2_normalize(x).astype(xl_ref.dtype)


# ----------------------------------------------------------------------------
# Predictor: natural (E_tile, HP) layout (no transpose round trip). Final
# (H -> 1) layer is a VPU multiply + lane reduce; sigmoid on the VPU/EUP.
# ----------------------------------------------------------------------------
def _predictor_kernel(xi_ref, xj_ref, wp0_ref, bp0_ref, wp1_ref, bp1_ref, out_ref):
    # xi*xj stays in the storage dtype (needed as MXU operand anyway).
    z = xi_ref[...] * xj_ref[...]                                   # (TE, HP)
    h = jnp.dot(z.astype(wp0_ref.dtype), wp0_ref[...],
                preferred_element_type=jnp.float32) + bp0_ref[...]  # (TE, HP)
    h = jnp.maximum(h, 0.0)
    logits = jnp.sum(h * wp1_ref[...], axis=-1, keepdims=True) + bp1_ref[...]
    out_ref[...] = jax.nn.sigmoid(logits)                           # (TE, 1)


# ----------------------------------------------------------------------------
# Wrapper
# ----------------------------------------------------------------------------
def mlps_forward(feat, links, params, *, tile_n=2048, tile_e=4096,
                 compute_dtype=jnp.float32):
    """feat: (N, F) f32, links: (2, E) int32. Returns (E, 1) f32 probabilities."""
    N, F = feat.shape
    H = params["w0"].shape[1]
    E = links.shape[1]
    HP = _round_up(H, LANE)
    f32 = jnp.float32

    tile_n = max(SUBLANE, min(_round_up(tile_n, SUBLANE), _round_up(N, SUBLANE)))
    n_tiles = pl.cdiv(N, tile_n)
    tile_e = max(SUBLANE, min(_round_up(tile_e, SUBLANE), _round_up(E, SUBLANE)))
    e_tiles = pl.cdiv(E, tile_e)

    # ---- padded / lane-dense parameters (tiny; constant index_maps keep them
    # VMEM-resident across the whole sweep) ------------------------------------
    w0 = _pad2d(params["w0"], F, HP).astype(compute_dtype)
    b0 = _pad2d(params["b0"], 1, HP).astype(f32)
    g0 = _pad2d(params["g0"], 1, HP).astype(f32)
    be0 = _pad2d(params["be0"], 1, HP).astype(f32)
    w1 = _pad2d(params["w1"], HP, HP).astype(compute_dtype)
    b1 = _pad2d(params["b1"], 1, HP).astype(f32)
    g1 = _pad2d(params["g1"], 1, HP).astype(f32)
    be1 = _pad2d(params["be1"], 1, HP).astype(f32)
    wp0 = _pad2d(params["wp0"], HP, HP).astype(compute_dtype)
    bp0 = _pad2d(params["bp0"], 1, HP).astype(f32)
    wp1_row = _pad2d(params["wp1"], HP, 1).T.astype(f32)   # (1, HP)
    bp1 = params["bp1"].astype(f32)                        # (1, 1)

    row_spec = pl.BlockSpec((tile_n, HP), lambda i: (i, 0))
    vec_spec = pl.BlockSpec((1, HP), lambda i: (0, 0))
    stats_spec = pl.BlockSpec((1, SUBLANE, HP), lambda i: (i, 0, 0))
    stats_shape = jax.ShapeDtypeStruct((n_tiles, SUBLANE, HP), f32)
    enc_params = pltpu.CompilerParams(dimension_semantics=("parallel",),
                                      vmem_limit_bytes=VMEM_LIMIT)

    # ---- pass 1: linear 0 + per-tile BN0 partial statistics -------------------
    h0, st0 = pl.pallas_call(
        functools.partial(_layer0_kernel, N),
        grid=(n_tiles,),
        in_specs=[pl.BlockSpec((tile_n, F), lambda i: (i, 0)),
                  pl.BlockSpec((F, HP), lambda i: (0, 0)),
                  vec_spec],
        out_specs=(row_spec, stats_spec),
        out_shape=(jax.ShapeDtypeStruct((N, HP), compute_dtype), stats_shape),
        compiler_params=enc_params,
    )(feat, w0, b0)

    # BN0 finalisation on tiny arrays — plain-JAX glue, all f32.
    s0 = jnp.sum(st0[:, 0, :], axis=0, keepdims=True)
    ss0 = jnp.sum(st0[:, 1, :], axis=0, keepdims=True)
    mu0 = s0 / N
    var0 = jnp.maximum(ss0 / N - mu0 * mu0, 0.0)
    sc0 = g0 * jax.lax.rsqrt(var0 + BN_EPS)
    sh0 = be0 - mu0 * sc0

    # ---- pass 2: BN0 apply + ReLU + L2 (recomputed, not stored), linear 1,
    #              per-tile BN1 partial statistics ------------------------------
    h1, st1 = pl.pallas_call(
        functools.partial(_layer1_kernel, N),
        grid=(n_tiles,),
        in_specs=[row_spec, vec_spec, vec_spec,
                  pl.BlockSpec((HP, HP), lambda i: (0, 0)), vec_spec],
        out_specs=(row_spec, stats_spec),
        out_shape=(jax.ShapeDtypeStruct((N, HP), compute_dtype), stats_shape),
        compiler_params=enc_params,
    )(h0, sc0, sh0, w1, b1)

    s1 = jnp.sum(st1[:, 0, :], axis=0, keepdims=True)
    ss1 = jnp.sum(st1[:, 1, :], axis=0, keepdims=True)
    mu1 = s1 / N
    var1 = jnp.maximum(ss1 / N - mu1 * mu1, 0.0)
    sc1 = g1 * jax.lax.rsqrt(var1 + BN_EPS)
    sh1 = be1 - mu1 * sc1

    # ---- pass 3: BN1 apply + residual (x0 recomputed) + L2 -> node embeddings -
    x_l = pl.pallas_call(
        _embed_kernel,
        grid=(n_tiles,),
        in_specs=[row_spec, row_spec, vec_spec, vec_spec, vec_spec, vec_spec],
        out_specs=row_spec,
        out_shape=jax.ShapeDtypeStruct((N, HP), compute_dtype),
        compiler_params=enc_params,
    )(h0, h1, sc0, sh0, sc1, sh1)

    # ---- edge gather (XLA) + predictor ----------------------------------------
    # x_l (and hence xi/xj) are bf16 when compute_dtype=bf16 -> half the bytes.
    xi = jnp.take(x_l, links[0], axis=0)     # (E, HP)
    xj = jnp.take(x_l, links[1], axis=0)     # (E, HP)

    edge_spec = pl.BlockSpec((tile_e, HP), lambda e: (e, 0))
    cvec = lambda shape: pl.BlockSpec(shape, lambda e: (0, 0))

    probs = pl.pallas_call(
        _predictor_kernel,
        grid=(e_tiles,),
        in_specs=[edge_spec, edge_spec,
                  cvec((HP, HP)), cvec((1, HP)), cvec((1, HP)), cvec((1, 1))],
        out_specs=pl.BlockSpec((tile_e, 1), lambda e: (e, 0)),
        out_shape=jax.ShapeDtypeStruct((E, 1), f32),
        compiler_params=pltpu.CompilerParams(
            dimension_semantics=("parallel",), vmem_limit_bytes=VMEM_LIMIT),
    )(xi, xj, wp0, bp0, wp1_row, bp1)

    return probs


# ----------------------------------------------------------------------------
# Pure-JAX reference (same math, un-tiled, f32) for a sanity check.
# ----------------------------------------------------------------------------
def mlps_forward_ref(feat, links, p):
    def bn(x, g, b):
        mu = jnp.mean(x, axis=0, keepdims=True)
        var = jnp.mean((x - mu) ** 2, axis=0, keepdims=True)
        return (x - mu) / jnp.sqrt(var + BN_EPS) * g + b

    def l2n(x):
        n = jnp.sqrt(jnp.sum(x * x, axis=-1, keepdims=True))
        return x / jnp.maximum(n, L2_EPS)

    h = feat @ p["w0"] + p["b0"]
    h = l2n(jnp.maximum(bn(h, p["g0"], p["be0"]), 0.0))
    x_last = h
    h = h @ p["w1"] + p["b1"]
    x = l2n(bn(h, p["g1"], p["be1"]) + x_last)

    z = x[links[0]] * x[links[1]]
    hh = jnp.maximum(z @ p["wp0"] + p["bp0"], 0.0)
    return jax.nn.sigmoid(hh @ p["wp1"] + p["bp1"])


if __name__ == "__main__":
    # N deliberately NOT a multiple of the row tile -> exercises ragged masking.
    N, F, H, E = 60, 16, 32, 8

    key = jax.random.PRNGKey(0)
    ks = jax.random.split(key, 8)

    feat = jax.random.normal(ks[0], (N, F), dtype=jnp.float32)
    links = jax.random.randint(ks[1], (2, E), 0, N, dtype=jnp.int32)

    params = {
        # encoder layer 0: Linear(F -> H) + BN(H)
        "w0": jax.random.normal(ks[2], (F, H), dtype=jnp.float32) * 0.1,
        "b0": jax.random.normal(ks[3], (1, H), dtype=jnp.float32) * 0.01,
        "g0": jnp.ones((1, H), jnp.float32),
        "be0": jnp.zeros((1, H), jnp.float32),
        # encoder layer 1: Linear(H -> H) + BN(H)
        "w1": jax.random.normal(ks[4], (H, H), dtype=jnp.float32) * 0.1,
        "b1": jax.random.normal(ks[5], (1, H), dtype=jnp.float32) * 0.01,
        "g1": jnp.ones((1, H), jnp.float32),
        "be1": jnp.zeros((1, H), jnp.float32),
        # LinkPredictor: Linear(H -> H), Linear(H -> 1)
        "wp0": jax.random.normal(ks[6], (H, H), dtype=jnp.float32) * 0.1,
        "bp0": jnp.zeros((1, H), jnp.float32),
        "wp1": jax.random.normal(ks[7], (H, 1), dtype=jnp.float32) * 0.1,
        "bp1": jnp.zeros((1, 1), jnp.float32),
    }

    ref = mlps_forward_ref(feat, links, params)

    # f32 path — small tiles so the test runs a multi-step grid with a ragged
    # boundary block (60 rows, 32-row tiles).
    out = mlps_forward(feat, links, params, tile_n=32, tile_e=128,
                       compute_dtype=jnp.float32)
    out = jax.block_until_ready(out)
    assert out.shape == (E, 1)
    assert jnp.allclose(out, ref, atol=1e-3, rtol=1e-3), "f32 mismatch vs reference"

    # bf16 storage/MXU-operand path (f32 BN/L2/stats) — looser tolerance.
    out_bf16 = mlps_forward(feat, links, params, tile_n=32, tile_e=128,
                            compute_dtype=jnp.bfloat16)
    out_bf16 = jax.block_until_ready(out_bf16)
    assert jnp.allclose(out_bf16, ref, atol=5e-2, rtol=0.0), "bf16 mismatch vs reference"

    print("KERNEL_OK")
</pallas_src>

<mosaic_0001>
module attributes {stable_mosaic.version = 11 : i64} {
  func.func @_layer0_kernel(%arg0: i32, %arg1: memref<32x16xf32, #tpu.memory_space<vmem>>, %arg2: memref<16x128xf32, #tpu.memory_space<vmem>>, %arg3: memref<1x128xf32, #tpu.memory_space<vmem>>, %arg4: memref<32x128xf32, #tpu.memory_space<vmem>>, %arg5: memref<1x8x128xf32, #tpu.memory_space<vmem>>) attributes {dimension_semantics = [#tpu.dimension_semantics<parallel>], iteration_bounds = array<i64: 2>, scalar_prefetch = 0 : i64, scratch_operands = 0 : i64, tpu.core_type = #tpu.core_type<tc>, window_params = [{transform_indices = @transform_0, window_bounds = array<i64: 32, 16>}, {pipeline_mode = #tpu.pipeline_mode<synchronous>, transform_indices = @transform_1, window_bounds = array<i64: 16, 128>}, {pipeline_mode = #tpu.pipeline_mode<synchronous>, transform_indices = @transform_2, window_bounds = array<i64: 1, 128>}, {transform_indices = @transform_3, window_bounds = array<i64: 32, 128>}, {transform_indices = @transform_4, window_bounds = array<i64: 1, 8, 128>}]} {
    %c0 = arith.constant 0 : index
    %c0_0 = arith.constant 0 : index
    %0 = vector.load %arg1[%c0, %c0_0] : memref<32x16xf32, #tpu.memory_space<vmem>>, vector<32x16xf32>
    %c0_1 = arith.constant 0 : index
    %c0_2 = arith.constant 0 : index
    %1 = vector.load %arg2[%c0_1, %c0_2] : memref<16x128xf32, #tpu.memory_space<vmem>>, vector<16x128xf32>
    %cst = arith.constant dense<0.000000e+00> : vector<32x128xf32>
    %2 = tpu.matmul %0, %1, %cst {dimension_numbers = #tpu.dot_dimension_numbers<[1], [0], [0], [1], [0, 0, 1, 1], [], []>} : vector<32x16xf32>, vector<16x128xf32>, vector<32x128xf32> -> vector<32x128xf32>
    %c0_3 = arith.constant 0 : index
    %c0_4 = arith.constant 0 : index
    %3 = vector.load %arg3[%c0_3, %c0_4] : memref<1x128xf32, #tpu.memory_space<vmem>>, vector<1x128xf32>
    %4 = vector.broadcast %3 : vector<1x128xf32> to vector<32x128xf32>
    %5 = arith.addf %2, %4 : vector<32x128xf32>
    %c0_5 = arith.constant 0 : index
    %c0_6 = arith.constant 0 : index
    %6 = vector.load %arg4[%c0_5, %c0_6] : memref<32x128xf32, #tpu.memory_space<vmem>>, vector<32x128xf32>
    tpu.vector_store %arg4[%c0_5, %c0_6], %5 {strides = array<i32>} : memref<32x128xf32, #tpu.memory_space<vmem>>, vector<32x128xf32>,
    %c32_i32 = arith.constant 32 : i32
    %7 = arith.muli %arg0, %c32_i32 : i32
    %8 = tpu.iota {dimensions = array<i32: 0>} : vector<32x128xi32>
    %9 = vector.broadcast %7 : i32 to vector<32x128xi32>
    %10 = arith.addi %8, %9 : vector<32x128xi32>
    %c60_i32 = arith.constant 60 : i32
    %11 = vector.broadcast %c60_i32 : i32 to vector<32x128xi32>
    %12 = arith.cmpi slt, %10, %11 : vector<32x128xi32>
    %cst_7 = arith.constant 0.000000e+00 : f32
    %13 = vector.broadcast %cst_7 : f32 to vector<32x128xf32>
    %14 = arith.select %12, %5, %13 : vector<32x128xi1>, vector<32x128xf32>
    %cst_8 = arith.constant dense<0.000000e+00> : vector<128xf32>
    %15 = vector.multi_reduction <add>, %14, %cst_8 [0] : vector<32x128xf32> to vector<128xf32>
    %16 = vector.shape_cast %15 : vector<128xf32> to vector<1x128xf32>
    %17 = arith.mulf %14, %14 : vector<32x128xf32>
    %cst_9 = arith.constant dense<0.000000e+00> : vector<128xf32>
    %18 = vector.multi_reduction <add>, %17, %cst_9 [0] : vector<32x128xf32> to vector<128xf32>
    %19 = vector.shape_cast %18 : vector<128xf32> to vector<1x128xf32>
    %cst_10 = arith.constant 0.000000e+00 : f32
    %20 = vector.broadcast %cst_10 : f32 to vector<6x128xf32>
    %21 = tpu.concatenate %16, %19, %20 in 0 : vector<1x128xf32>, vector<1x128xf32>, vector<6x128xf32> -> vector<8x128xf32>
    %22 = vector.shape_cast %21 : vector<8x128xf32> to vector<1x8x128xf32>
    %c0_11 = arith.constant 0 : index
    %c0_12 = arith.constant 0 : index
    %c0_13 = arith.constant 0 : index
    %23 = vector.load %arg5[%c0_11, %c0_12, %c0_13] : memref<1x8x128xf32, #tpu.memory_space<vmem>>, vector<1x8x128xf32>
    tpu.vector_store %arg5[%c0_11, %c0_12, %c0_13], %22 {strides = array<i32>} : memref<1x8x128xf32, #tpu.memory_space<vmem>>, vector<1x8x128xf32>,
    return
  }
  func.func @transform_0(%arg0: i32) -> (i32, i32) {
    %c0_i32 = arith.constant 0 : i32
    %c0_i32_0 = arith.constant 0 : i32
    return %arg0, %c0_i32 : i32, i32
  }
  func.func @transform_1(%arg0: i32) -> (i32, i32) {
    %c0_i32 = arith.constant 0 : i32
    %c0_i32_0 = arith.constant 0 : i32
    %c0_i32_1 = arith.constant 0 : i32
    return %c0_i32, %c0_i32_0 : i32, i32
  }
  func.func @transform_2(%arg0: i32) -> (i32, i32) {
    %c0_i32 = arith.constant 0 : i32
    %c0_i32_0 = arith.constant 0 : i32
    %c0_i32_1 = arith.constant 0 : i32
    return %c0_i32, %c0_i32_0 : i32, i32
  }
  func.func @transform_3(%arg0: i32) -> (i32, i32) {
    %c0_i32 = arith.constant 0 : i32
    %c0_i32_0 = arith.constant 0 : i32
    return %arg0, %c0_i32 : i32, i32
  }
  func.func @transform_4(%arg0: i32) -> (i32, i32, i32) {
    %c0_i32 = arith.constant 0 : i32
    %c0_i32_0 = arith.constant 0 : i32
    %c0_i32_1 = arith.constant 0 : i32
    return %arg0, %c0_i32, %c0_i32_0 : i32, i32, i32
  }
}

</mosaic_0001>

<llo_original>
// kernel: tpu_custom_call.1
$region0: #{tpu_custom_call.1}
  #allocation0 [shape = 'u32[]', space=smem, size = 0x4, offset = 0x4, fixed_abs, tag = 'smem constant byte address 0x4 - core index']
  #allocation1 [shape = 'u32[144,128]{1,0:T(1,128)}', space=vmem, size = 0x12000, scoped, tag = 'internal scratch']
  %s0 = inlined_call_operand.vmem [shape: f32[60,16], index: 0, kind: input, shape index: {}]
  %s1 = inlined_call_operand.vmem [shape: f32[16,128], index: 1, kind: input, shape index: {}]
  %s2 = inlined_call_operand.vmem [shape: f32[1,128], index: 2, kind: input, shape index: {}]
  %s3 = inlined_call_operand.hbm [shape: f32[60,128], index: 3, kind: output, shape index: {0}]
  %s4 = inlined_call_operand.hbm [shape: f32[2,8,128], index: 4, kind: output, shape index: {1}]
  %5 = xla_tuple %s3, %s4
  %s6 = sld [smem:[#allocation0]]
  $region53: #{tpu_custom_call.1} parent=0
    _
  %s8 = ssub.s32 1, %s6
  %s9 = scalar_select 0, %s8, %s6
  $region1: #{tpu_custom_call.1} parent=0
    #allocation2 [shape = 'u8[32768]{0}', space=vmem, size = 0x8000, scoped, tag = 'output window, operand 0']
    #allocation3 [shape = 's32[2]{0}', space=sflag, size = 0x8, scoped, tag = 'scoped memory for tpu_custom_call.1']
    #allocation4 [shape = 'u8[8192]{0}', space=vmem, size = 0x2000, scoped, tag = 'output window, operand 1']
    #allocation5 [shape = 's32[2]{0}', space=sflag, size = 0x8, scoped, tag = 'scoped memory for tpu_custom_call.1']
    %10 = vsyncpa [#allocation3], 0
    %s11 = scalar_lea.sflag [#allocation3], 1
    %12 = vsyncpa %s11, 0
    %13 = vsyncpa [#allocation5], 0
    %s14 = scalar_lea.sflag [#allocation5], 1
    %15 = vsyncpa %s14, 0
    loop: start=0, step=1, limit=4
    $region2: #{tpu_custom_call.1} parent=1 // loop_pre_header
      _
    $region3: #{tpu_custom_call.1} parent=1 // loop_header
      %s17 = sphi 0, %s21
      %p18 = scmp.ge.s32.totalorder %s17, 4
      %s27 = sphi 0, %s29
      %s30 = sphi 0, %s27
      %s31 = sphi 0, %s30
      %s47 = sphi 0, %s31
      %s51 = sphi 0, %s51
      %s53 = sphi 0, %s51
      %s54 = sphi 0, %s53
      %s68 = sphi 0, %s54
      %s72 = sphi 0, %s72
      %s74 = sphi 0, %s72
      %s75 = sphi 0, %s74
      %s89 = sphi 0, %s75
      %s95 = sphi 0, %s97
      %s98 = sphi 0, %s95
      %s99 = sphi 0, %s98
      %s115 = sphi 0, %s99
      %s121 = sphi 0, %s123
      %s124 = sphi 0, %s121
      %s125 = sphi 0, %s124
      %s141 = sphi 0, %s125
    $region4: #{tpu_custom_call.1} parent=1 // loop_header_branch
      %20 = sbr.rel (%p18) target = $region8
    $region5: #{tpu_custom_call.1} parent=1 // loop_body
      %s22 = ssub.s32 %s17, 1
      %s23 = ssub.s32 %s17, 2
      %s24 = sadd.s32 %s17, 1
      %s25 = ssub.s32 %s17, %s24
      %p26 = scmp.eq.s32.totalorder %s25, 0
      %s28 = sadd.s32 %s27, 1
      %s29 = scalar_select %p26, %s27, %s28
      %p32 = pneg %p26
      %p33 = scmp.eq.s32.totalorder %s17, 1
      %p34 = por %p32, %p33
      %p35 = scmp.ne.s32.totalorder %s27, %s30
      %p36 = scmp.eq.s32.totalorder %s17, 0
      %p37 = por %p35, %p36
      %p38 = scmp.ne.s32.totalorder %s27, %s30
      %p39 = scmp.eq.s32.totalorder %s22, 1
      %p40 = por %p38, %p39
      %p41 = scmp.ne.s32.totalorder %s30, %s31
      %p42 = scmp.eq.s32.totalorder %s22, 0
      %p43 = por %p41, %p42
      %p44 = scmp.ne.s32.totalorder %s30, %s31
      %p45 = scmp.eq.s32.totalorder %s23, 1
      %p46 = por %p44, %p45
      %p48 = scmp.ne.s32.totalorder %s31, %s47
      %p49 = scmp.eq.s32.totalorder %s23, 0
      %p50 = por %p48, %p49
      %s52 = sadd.s32 %s51, 1
      %p55 = scmp.eq.s32.totalorder %s17, 1
      %p56 = scmp.ne.s32.totalorder %s51, %s53
      %p57 = scmp.eq.s32.totalorder %s17, 0
      %p58 = por %p56, %p57
      %p59 = scmp.ne.s32.totalorder %s51, %s53
      %p60 = scmp.eq.s32.totalorder %s22, 1
      %p61 = por %p59, %p60
      %p62 = scmp.ne.s32.totalorder %s53, %s54
      %p63 = scmp.eq.s32.totalorder %s22, 0
      %p64 = por %p62, %p63
      %p65 = scmp.ne.s32.totalorder %s53, %s54
      %p66 = scmp.eq.s32.totalorder %s23, 1
      %p67 = por %p65, %p66
      %p69 = scmp.ne.s32.totalorder %s54, %s68
      %p70 = scmp.eq.s32.totalorder %s23, 0
      %p71 = por %p69, %p70
      %s73 = sadd.s32 %s72, 1
      %p76 = scmp.eq.s32.totalorder %s17, 1
      %p77 = scmp.ne.s32.totalorder %s72, %s74
      %p78 = scmp.eq.s32.totalorder %s17, 0
      %p79 = por %p77, %p78
      %p80 = scmp.ne.s32.totalorder %s72, %s74
      %p81 = scmp.eq.s32.totalorder %s22, 1
      %p82 = por %p80, %p81
      %p83 = scmp.ne.s32.totalorder %s74, %s75
      %p84 = scmp.eq.s32.totalorder %s22, 0
      %p85 = por %p83, %p84
      %p86 = scmp.ne.s32.totalorder %s74, %s75
      %p87 = scmp.eq.s32.totalorder %s23, 1
      %p88 = por %p86, %p87
      %p90 = scmp.ne.s32.totalorder %s75, %s89
      %p91 = scmp.eq.s32.totalorder %s23, 0
      %p92 = por %p90, %p91
      %s93 = ssub.s32 %s17, %s24
      %p94 = scmp.eq.s32.totalorder %s93, 0
      %s96 = sadd.s32 %s95, 1
      %s97 = scalar_select %p94, %s95, %s96
      %p100 = pneg %p94
      %p101 = scmp.eq.s32.totalorder %s17, 1
      %p102 = por %p100, %p101
      %p103 = scmp.ne.s32.totalorder %s95, %s98
      %p104 = scmp.eq.s32.totalorder %s17, 0
      %p105 = por %p103, %p104
      %p106 = scmp.ne.s32.totalorder %s95, %s98
      %p107 = scmp.eq.s32.totalorder %s22, 1
      %p108 = por %p106, %p107
      %p109 = scmp.ne.s32.totalorder %s98, %s99
      %p110 = scmp.eq.s32.totalorder %s22, 0
      %p111 = por %p109, %p110
      %p112 = scmp.ne.s32.totalorder %s98, %s99
      %p113 = scmp.eq.s32.totalorder %s23, 1
      %p114 = por %p112, %p113
      %p116 = scmp.ne.s32.totalorder %s99, %s115
      %p117 = scmp.eq.s32.totalorder %s23, 0
      %p118 = por %p116, %p117
      %s119 = ssub.s32 %s17, %s24
      %p120 = scmp.eq.s32.totalorder %s119, 0
      %s122 = sadd.s32 %s121, 1
      %s123 = scalar_select %p120, %s121, %s122
      %p126 = pneg %p120
      %p127 = scmp.eq.s32.totalorder %s17, 1
      %p128 = por %p126, %p127
      %p129 = scmp.ne.s32.totalorder %s121, %s124
      %p130 = scmp.eq.s32.totalorder %s17, 0
      %p131 = por %p129, %p130
      %p132 = scmp.ne.s32.totalorder %s121, %s124
      %p133 = scmp.eq.s32.totalorder %s22, 1
      %p134 = por %p132, %p133
      %p135 = scmp.ne.s32.totalorder %s124, %s125
      %p136 = scmp.eq.s32.totalorder %s22, 0
      %p137 = por %p135, %p136
      %p138 = scmp.ne.s32.totalorder %s124, %s125
      %p139 = scmp.eq.s32.totalorder %s23, 1
      %p140 = por %p138, %p139
      %p142 = scmp.ne.s32.totalorder %s125, %s141
      %p143 = scmp.eq.s32.totalorder %s23, 0
      %p144 = por %p142, %p143
      %p145 = scmp.le.s32.totalorder 1, %s17
      %p146 = scmp.lt.s32.totalorder %s17, 3
      %p147 = pnand %p145, %p146
      %p148 = pneg %p147
      // Predicated region
      $region9: #{tpu_custom_call.1} parent=5 // pred_check
        _
      $region10: #{tpu_custom_call.1} parent=5 // pred_check_branch
        %150 = sbr.rel (%p147) target = $region12
      $region11: #{tpu_custom_call.1} parent=5 // pred_region
        %s151 = ssub.s32 %s17, 1
        // Predicated region
        $region13: #{tpu_custom_call.1} parent=11 // pred_check
          %p152 = pneg %p64
        $region14: #{tpu_custom_call.1} parent=11 // pred_check_branch
          %154 = sbr.rel (%p152) target = $region16
        $region15: #{tpu_custom_call.1} parent=11 // pred_region
          _
        $region16: #{tpu_custom_call.1} parent=11 // pred_fallthru
          _
        // Predicated region
        $region17: #{tpu_custom_call.1} parent=11 // pred_check
          %p155 = pneg %p85
        $region18: #{tpu_custom_call.1} parent=11 // pred_check_branch
          %157 = sbr.rel (%p155) target = $region20
        $region19: #{tpu_custom_call.1} parent=11 // pred_region
          _
        $region20: #{tpu_custom_call.1} parent=11 // pred_fallthru
          _
      $region12: #{tpu_custom_call.1} parent=5 // pred_fallthru
        _
      %p158 = scmp.lt.s32.totalorder %s17, 2
      // Predicated region
      $region21: #{tpu_custom_call.1} parent=5 // pred_check
        %p159 = pneg %p158
      $region22: #{tpu_custom_call.1} parent=5 // pred_check_branch
        %161 = sbr.rel (%p159) target = $region24
      $region23: #{tpu_custom_call.1} parent=5 // pred_region
        // Predicated region
        $region25: #{tpu_custom_call.1} parent=23 // pred_check
          %p162 = pneg %p37
        $region26: #{tpu_custom_call.1} parent=23 // pred_check_branch
          %164 = sbr.rel (%p162) target = $region28
        $region27: #{tpu_custom_call.1} parent=23 // pred_region
          %s165 = smul.u32 4, %s17
          %p166 = scmp.lt.s32.totalorder %s165, 7
          %s167 = scalar_select %p166, %s165, 7
          %s168 = smul.addr %s167, 8
          %s169 = scalar_lea.vmem %s0, %s168
          %s170 = smul.u32 4, %s17
        $region28: #{tpu_custom_call.1} parent=23 // pred_fallthru
          _
      $region24: #{tpu_custom_call.1} parent=5 // pred_fallthru
        _
      %p171 = scmp.le.s32.totalorder 1, %s17
      %p172 = scmp.lt.s32.totalorder %s17, 3
      %p173 = pnand %p171, %p172
      %p174 = pneg %p173
      // Predicated region
      $region29: #{tpu_custom_call.1} parent=5 // pred_check
        _
      $region30: #{tpu_custom_call.1} parent=5 // pred_check_branch
        %176 = sbr.rel (%p173) target = $region32
      $region31: #{tpu_custom_call.1} parent=5 // pred_region
        %s177 = ssub.s32 %s17, 1
        %s178 = smul.u32 4, %s22
        %p179 = scmp.lt.s32.totalorder %s178, 7
        %s180 = scalar_select %p179, %s178, 7
        %s181 = smul.addr %s180, 8
        %s182 = scalar_lea.vmem %s0, %s181
        %p183 = pneg %p43
        %p184 = pneg %p40
        %p185 = pneg %p64
        %p186 = pneg %p61
        %p187 = pneg %p85
        %p188 = pneg %p82
        %p189 = pneg %p111
        %p190 = pneg %p108
        %s191 = sand.u32 %s98, 1
        %s192 = scalar_lea.sflag [#allocation3], %s191
        %s193 = sand.u32 %s98, 1
        %s194 = smul.addr %s193, 32
        %s195 = scalar_lea.vmem [#allocation2], %s194
        %p196 = pneg %p137
        %p197 = pneg %p134
        %s198 = sand.u32 %s124, 1
        %s199 = scalar_lea.sflag [#allocation5], %s198
        %s200 = sand.u32 %s124, 1
        %s201 = smul.addr %s200, 8
        %s202 = scalar_lea.vmem [#allocation4], %s201
        %s203 = smul.u32 4, %s22
        %p204 = scmp.lt.s32.totalorder %s203, 7
        %s205 = scalar_select %p204, %s203, 7
        %s206 = smul.addr %s205, 8
        %s207 = scalar_lea.vmem %s0, %s206
        %s208 = smul.u32 4, %s22
        %s209 = smul.u32 4, %s22
        %v210 = vld [vmem:[%s207] sm:$0xff]
        %v211 = vld [vmem:[%s207 + $0x8] sm:$0xff]
        %v212 = vld [vmem:[%s207 + $0x10] sm:$0xff]
        %v213 = vld [vmem:[%s207 + $0x18] sm:$0xff]
        %v214 = vld [vmem:[%s1] sm:$0xff]
        %v215 = vld [vmem:[%s1 + $0x8] sm:$0xff]
        %v216 = vld [vmem:[%s2] sm:$0x1]
        %v218 = vlaneseq
        %v219 = vshrl.u32 %v218, 7
        %v220 = vsub.s32 0, %v219
        %v221 = vrot.slane %v216, %v220
        %vm223 = vcmask 130048
        %v225 = vsel %vm223, %v210, 0
        %v228 = vsel %vm223, %v211, 0
        %v231 = vsel %vm223, %v212, 0
        %v234 = vsel %vm223, %v213, 0
        %236 = vmatprep.subr.mxu0 0.0
        %237 = vmatpush1.msra.mxu0 %v214
        %238 = vmatprep.subr.mxu0 0.0
        %239 = vmatpush1.msra.mxu0 %v215
        %240 = vmatprep.subr.mxu0 0.0
        %241 = vmatpush1.msra.mxu0 0.0
        %242 = vmatprep.subr.mxu0 0.0
        %243 = vmatpush1.msra.mxu0 0.0
        %244 = vmatprep.subr.mxu0 0.0
        %245 = vmatpush1.msra.mxu0 0.0
        %246 = vmatprep.subr.mxu0 0.0
        %247 = vmatpush1.msra.mxu0 0.0
        %248 = vmatprep.subr.mxu0 0.0
        %249 = vmatpush1.msra.mxu0 0.0
        %250 = vmatprep.subr.mxu0 0.0
        %251 = vmatpush1.msra.mxu0 0.0
        %252 = vmatprep.subr.mxu0 0.0
        %253 = vmatpush1.msra.mxu0 0.0
        %254 = vmatprep.subr.mxu0 0.0
        %255 = vmatpush1.msra.mxu0 0.0
        %256 = vmatprep.subr.mxu0 0.0
        %257 = vmatpush1.msra.mxu0 0.0
        %258 = vmatprep.subr.mxu0 0.0
        %259 = vmatpush1.msra.mxu0 0.0
        %260 = vmatprep.subr.mxu0 0.0
        %261 = vmatpush1.msra.mxu0 0.0
        %262 = vmatprep.subr.mxu0 0.0
        %263 = vmatpush1.msra.mxu0 0.0
        %264 = vmatprep.subr.mxu0 0.0
        %265 = vmatpush1.msra.mxu0 0.0
        %266 = vmatprep.subr.mxu0 0.0
        %267 = vmatpush1.msra.mxu0 0.0
        %268 = vmatprep.subr.mxu0 0.0
        %269 = vmatpush1.msra.mxu0 0.0
        %270 = vmatprep.subr.mxu0 0.0
        %271 = vmatpush1.msra.mxu0 0.0
        %272 = vmatprep.subr.mxu0 0.0
        %273 = vmatpush1.msra.mxu0 0.0
        %274 = vmatprep.subr.mxu0 0.0
        %275 = vmatpush1.msra.mxu0 0.0
        %276 = vmatprep.subr.mxu0 0.0
        %277 = vmatpush1.msra.mxu0 0.0
        %278 = vmatprep.subr.mxu0 0.0
        %279 = vmatpush1.msra.mxu0 0.0
        %280 = vmatprep.subr.mxu0 0.0
        %281 = vmatpush1.msra.mxu0 0.0
        %282 = vmatprep.subr.mxu0 0.0
        %283 = vmatpush1.msra.mxu0 0.0
        %284 = vmatprep.subr.mxu0 0.0
        %285 = vmatpush1.msra.mxu0 0.0
        %286 = vmatprep.subr.mxu0 0.0
        %287 = vmatpush1.msra.mxu0 0.0
        %288 = vmatprep.subr.mxu0 0.0
        %289 = vmatpush1.msra.mxu0 0.0
        %290 = vmatprep.subr.mxu0 0.0
        %291 = vmatpush1.msra.mxu0 0.0
        %292 = vmatprep.subr.mxu0 0.0
        %293 = vmatpush1.msra.mxu0 0.0
        %294 = vmatprep.subr.mxu0 0.0
        %295 = vmatpush1.msra.mxu0 0.0
        %296 = vmatprep.subr.mxu0 0.0
        %297 = vmatpush1.msra.mxu0 0.0
        %298 = vmatprep.subr.mxu0 0.0
        %299 = vmatpush1.msra.mxu0 0.0
        %300 = vmatprep.mubr.f32.mxu0 0.0
        %301 = vmatmul.mubr.f32.gmra.mrb[0].mxu0 %v225
        %v302 = vpop.f32.mrb[0].mxu0
        %v303 = vadd.f32 %v221, %v302
        %v304 = vpop.f32.mrb[0].mxu0
        %305 = vmatprep.mubr.f32.mxu0 0.0
        %306 = vmatmul.mubr.f32.gmra.mrb[0].mxu0 %v228
        %v307 = vpop.f32.mrb[0].mxu0
        %v308 = vadd.f32 %v221, %v307
        %v309 = vpop.f32.mrb[0].mxu0
        %310 = vmatprep.mubr.f32.mxu0 0.0
        %311 = vmatmul.mubr.f32.gmra.mrb[0].mxu0 %v231
        %v312 = vpop.f32.mrb[0].mxu0
        %v313 = vadd.f32 %v221, %v312
        %v314 = vpop.f32.mrb[0].mxu0
        %315 = vmatprep.mubr.f32.mxu0 0.0
        %316 = vmatmul.mubr.f32.gmra.mrb[0].mxu0 %v234
        %v317 = vpop.f32.mrb[0].mxu0
        %v318 = vadd.f32 %v221, %v317
        %v319 = vpop.f32.mrb[0].mxu0
        %320 = vdwg.mxu0
        %321 = vst [vmem:[%s195] sm:$0xff] %v303
        %322 = vst [vmem:[%s195 + $0x8] sm:$0xff] %v308
        %323 = vst [vmem:[%s195 + $0x10] sm:$0xff] %v313
        %324 = vst [vmem:[%s195 + $0x18] sm:$0xff] %v318
        %s325 = smul.u32 %s22, 32
        %v326 = vlaneseq
        %v327 = vshrl.u32 %v326, 7
        %v328 = vadd.s32 %v327, 8
        %v329 = vadd.s32 %v327, 16
        %v330 = vadd.s32 %v327, 24
        %v331 = vstv %s325
        %v332 = vadd.s32 %v327, %v331
        %v333 = vadd.s32 %v328, %v331
        %v334 = vadd.s32 %v329, %v331
        %v335 = vadd.s32 %v330, %v331
        %vm336 = vcmp.lt.s32.totalorder %v332, 60
        %vm337 = vcmp.lt.s32.totalorder %v333, 60
        %vm338 = vcmp.lt.s32.totalorder %v334, 60
        %vm339 = vcmp.lt.s32.totalorder %v335, 60
        %v340 = vsel %vm336, %v303, 0.0
        %v341 = vsel %vm337, %v308, 0.0
        %v342 = vsel %vm338, %v313, 0.0
        %v343 = vsel %vm339, %v318, 0.0
        %v344 = vadd.f32 %v340, %v341
        %v345 = vadd.f32 %v344, %v342
        %v346 = vadd.f32 %v345, %v343
        %v347 = vrot.slane %v346, 4
        %v348 = vadd.f32 %v346, %v347
        %v349 = vrot.slane %v348, 2
        %v350 = vadd.f32 %v348, %v349
        %v351 = vrot.slane %v350, 1
        %v352 = vadd.f32 %v350, %v351
        %v353 = vmul.f32 %v340, %v340
        %v354 = vmul.f32 %v341, %v341
        %v355 = vmul.f32 %v342, %v342
        %v356 = vmul.f32 %v343, %v343
        %v357 = vadd.f32 %v353, %v354
        %v358 = vadd.f32 %v357, %v355
        %v359 = vadd.f32 %v358, %v356
        %v360 = vrot.slane %v359, 4
        %v361 = vadd.f32 %v359, %v360
        %v362 = vrot.slane %v361, 2
        %v363 = vadd.f32 %v361, %v362
        %v364 = vrot.slane %v363, 1
        %v365 = vadd.f32 %v363, %v364
        %vm366 = vcmask 1040384
        %v367 = vsel %vm366, %v352, %v365
        %vm368 = vcmask 1041408
        %v369 = vsel %vm368, %v367, 0.0
        %370 = vst [vmem:[%s202] sm:$0xff] %v369
        %s371 = sand.u32 %s98, 1
        %s372 = scalar_lea.sflag [#allocation3], %s371
        %s373 = sand.u32 %s98, 1
        %s374 = smul.addr %s373, 32
        %s375 = scalar_lea.vmem [#allocation2], %s374
        %s376 = sand.u32 %s124, 1
        %s377 = scalar_lea.sflag [#allocation5], %s376
        %s378 = sand.u32 %s124, 1
        %s379 = smul.addr %s378, 8
        %s380 = scalar_lea.vmem [#allocation4], %s379
        // Predicated region
        $region33: #{tpu_custom_call.1} parent=31 // pred_check
          %p381 = pneg %p108
        $region34: #{tpu_custom_call.1} parent=31 // pred_check_branch
          %383 = sbr.rel (%p381) target = $region36
        $region35: #{tpu_custom_call.1} parent=31 // pred_region
          %s384 = smul.u32 4, %s22
          %s386 = ssub.s32 512, 512
          %387 = vsyncadd %s372, %s386
          %s388 = smul.addr %s384, 128
          %s389 = scalar_lea.hbm %s3, %s388
          %s390 = sshll.u32 %s375, 4
          %s391 = int_to_ptr.vmem [resolvable:$true] %s390
          %396 = dma.vmem_to_hbm [thread:$0]  %s391, 512, %s389, %s372, 128, 128, 8
        $region36: #{tpu_custom_call.1} parent=31 // pred_fallthru
          _
        // Predicated region
        $region37: #{tpu_custom_call.1} parent=31 // pred_check
          %p397 = pneg %p134
        $region38: #{tpu_custom_call.1} parent=31 // pred_check_branch
          %399 = sbr.rel (%p397) target = $region40
        $region39: #{tpu_custom_call.1} parent=31 // pred_region
          %s401 = ssub.s32 128, 128
          %402 = vsyncadd %s377, %s401
          %s403 = smul.addr %s22, 128
          %s404 = scalar_lea.hbm %s4, %s403
          %s406 = sshll.u32 %s380, 4
          %s407 = int_to_ptr.vmem [resolvable:$true] %s406
          %409 = dma.vmem_to_hbm [thread:$0]  %s407, 128, %s404, %s377
        $region40: #{tpu_custom_call.1} parent=31 // pred_fallthru
          _
      $region32: #{tpu_custom_call.1} parent=5 // pred_fallthru
        _
      %p410 = scmp.le.s32.totalorder 2, %s17
      // Predicated region
      $region41: #{tpu_custom_call.1} parent=5 // pred_check
        %p411 = pneg %p410
      $region42: #{tpu_custom_call.1} parent=5 // pred_check_branch
        %413 = sbr.rel (%p411) target = $region44
      $region43: #{tpu_custom_call.1} parent=5 // pred_region
        %s414 = ssub.s32 %s17, 2
        // Predicated region
        $region45: #{tpu_custom_call.1} parent=43 // pred_check
          %p415 = pneg %p114
        $region46: #{tpu_custom_call.1} parent=43 // pred_check_branch
          %417 = sbr.rel (%p415) target = $region48
        $region47: #{tpu_custom_call.1} parent=43 // pred_region
          %s418 = sand.u32 %s99, 1
          %s419 = scalar_lea.sflag [#allocation3], %s418
          %s420 = sand.u32 %s99, 1
          %s421 = smul.addr %s420, 32
          %s422 = scalar_lea.vmem [#allocation2], %s421
          %423 = dma.done %s419, 512
        $region48: #{tpu_custom_call.1} parent=43 // pred_fallthru
          _
        // Predicated region
        $region49: #{tpu_custom_call.1} parent=43 // pred_check
          %p424 = pneg %p140
        $region50: #{tpu_custom_call.1} parent=43 // pred_check_branch
          %426 = sbr.rel (%p424) target = $region52
        $region51: #{tpu_custom_call.1} parent=43 // pred_region
          %s427 = sand.u32 %s125, 1
          %s428 = scalar_lea.sflag [#allocation5], %s427
          %s429 = sand.u32 %s125, 1
          %s430 = smul.addr %s429, 8
          %s431 = scalar_lea.vmem [#allocation4], %s430
          %432 = dma.done %s428, 128
        $region52: #{tpu_custom_call.1} parent=43 // pred_fallthru
          _
      $region44: #{tpu_custom_call.1} parent=5 // pred_fallthru
        _
    $region6: #{tpu_custom_call.1} parent=1 // loop_footer
      %s21 = sadd.s32 1, %s17
    $region7: #{tpu_custom_call.1} parent=1 // loop_footer_branch
      %16 = sbr.rel target = $region3
    $region8: #{tpu_custom_call.1} parent=1 // loop_exit
      _
    %433 = vsyncpa [#allocation3], 1
    %s434 = scalar_lea.sflag [#allocation3], 1
    %435 = vsyncpa %s434, 1
    %436 = vsyncpa [#allocation5], 1
    %s437 = scalar_lea.sflag [#allocation5], 1
    %438 = vsyncpa %s437, 1

</llo_original>
